<compile_context>
chip_gen: v7x
topology: tpu7x:2x2x1
jax: 0.10.0
libtpu: 0.0.40
codegen_flags: <defaults>
</compile_context>

<pallas_src>
import jax
import jax.numpy as jnp
from jax.experimental import pallas as pl
from jax.experimental.pallas import tpu as pltpu


# --------------------------------------------------------------------------- kernel

def _convt2x2_tanh_kernel(w_ref, b_ref, x_ref, o_ref):
    # w_ref: (O*4, C)      resident weight, rows ordered (o, dy, dx)
    # b_ref: (O*4, 1)      per-row bias (f32, added post-accumulation)
    # x_ref: (bn, C, t)    bn batch elements, t = lane tile of flattened H*W pixels
    # o_ref: (bn, O*4, t)  lane-dense output tile
    w = w_ref[...]
    b = b_ref[...]
    for n in range(x_ref.shape[0]):            # bn <= 8: cheap static unroll
        acc = jnp.dot(w, x_ref[n], preferred_element_type=jnp.float32)
        o_ref[n] = jnp.tanh(acc + b).astype(o_ref.dtype)


# --------------------------------------------------------------------------- planning

def _vmem_capacity_bytes():
    """Per-core VMEM capacity; falls back to the smallest generation (v7x, 64 MiB)."""
    try:
        info = pltpu.get_tpu_info()
        cap = getattr(info, "vmem_capacity_bytes", None)
        if cap:
            return int(cap)
    except Exception:
        pass
    return 64 * 1024 * 1024


def _num_tensorcores():
    """Best-effort TensorCores-per-device (2 on megacore v4/v5p and on v7x)."""
    try:
        kind = jax.devices()[0].device_kind.lower()
    except Exception:
        return 1
    if any(tag in kind for tag in ("v4", "v5p", "v7")):
        return 2
    return 1


def _largest_divisor_leq(n, cap):
    cap = max(1, min(n, int(cap)))
    for d in range(cap, 0, -1):
        if n % d == 0:
            return d
    return 1


def _plan_tiles(N, C, HW, O4, out_bytes, in_bytes=4):
    """Pick (bn, t_hw, vmem_limit): lane tile over H*W, batch tile over N, sized from a
    generation-aware VMEM budget, with a 2-TensorCore-aware even-grid adjustment."""
    cap = _vmem_capacity_bytes()
    budget = min(int(cap * 0.6), 48 * 1024 * 1024)          # pipeline-buffer budget
    const = 2 * (O4 * C * in_bytes + O4 * 4)                # weight + bias (counted 2x)
    per_lane = 2 * (C * in_bytes + O4 * out_bytes)          # double-buffered in + out

    # Lane tile: largest multiple-of-128 divisor of HW that fits the budget at bn=1.
    if HW % 128 == 0:
        q = HW // 128
        q_cap = max(1, (budget - const) // max(1, per_lane * 128))
        t_hw = 128 * _largest_divisor_leq(q, q_cap)
    else:
        # Full-HW lane block is always a legal BlockSpec (block dim == array dim).
        # TODO(synk): ragged HW (< multiple of 128) -> masked lane stores; pad upstream if hot.
        t_hw = HW

    # Batch tile: largest divisor of N that fits; capped at 8 (static unroll in kernel).
    bn_cap = max(1, (budget - const) // max(1, per_lane * t_hw))
    bn = _largest_divisor_leq(N, min(8, bn_cap))

    # Dual-TensorCore parts only: make the parallel grid length even (load balance).
    if _num_tensorcores() >= 2:
        steps = (N // bn) * (HW // t_hw)
        if steps % 2 != 0:
            if bn % 2 == 0:
                bn //= 2
            elif t_hw % 256 == 0:
                t_hw //= 2

    per_step = const + per_lane * t_hw * bn
    vmem_limit = int(min(cap * 0.85, max(32 * 1024 * 1024, 2 * per_step)))
    return bn, t_hw, vmem_limit


# --------------------------------------------------------------------------- wrapper

def convtranspose2d_tanh(x_nchw, weight, bias, *, out_dtype=None, depth_to_space=True):
    """Equivalent of nn.ConvTranspose2d(C, O, kernel_size=2, stride=2, padding=0,
    bias=True) followed by nn.Tanh().

    x_nchw : (N, C, H, W)  float32
    weight : (C, O, 2, 2)  float32   (PyTorch ConvTranspose2d weight layout)
    bias   : (O,)          float32
    out_dtype       : dtype of the returned array (default: x dtype).  bf16 halves the
                      dominant output HBM stream; tanh is still computed in f32.
    depth_to_space  : if False, return the blocked layout (N, O, 2, 2, H, W) with
                      out[n,o,dy,dx,h,w] = y[n,o,2h+dy,2w+dx] and skip the final XLA
                      rearrangement pass entirely.
    """
    N, C, H, W = x_nchw.shape
    O = weight.shape[1]
    O4 = 4 * O
    HW = H * W
    out_dtype = x_nchw.dtype if out_dtype is None else jnp.dtype(out_dtype)
    out_bytes = jnp.dtype(out_dtype).itemsize

    # Free views / tiny rearrangements only -- no full-tensor HBM pass on x.
    x3 = x_nchw.reshape(N, C, HW)                                  # contiguous merge
    w_mat = weight.transpose(1, 2, 3, 0).reshape(O4, C)            # rows = (o, dy, dx)
    b_mat = jnp.repeat(bias.astype(jnp.float32), 4).reshape(O4, 1)

    bn, t_hw, vmem_limit = _plan_tiles(N, C, HW, O4, out_bytes)
    grid = (N // bn, HW // t_hw)

    M = N * HW
    cost = pl.CostEstimate(
        flops=2 * M * O4 * C,
        transcendentals=M * O4,
        bytes_accessed=M * C * 4 + M * O4 * out_bytes + O4 * C * 4 + O4 * 4,
    )

    out3 = pl.pallas_call(
        _convt2x2_tanh_kernel,
        out_shape=jax.ShapeDtypeStruct((N, O4, HW), out_dtype),
        grid_spec=pltpu.PrefetchScalarGridSpec(
            num_scalar_prefetch=0,
            grid=grid,
            in_specs=[
                pl.BlockSpec((O4, C), lambda i, j: (0, 0)),        # weight, resident
                pl.BlockSpec((O4, 1), lambda i, j: (0, 0)),        # bias, resident
                pl.BlockSpec((bn, C, t_hw), lambda i, j: (i, 0, j)),   # streamed pixels
            ],
            out_specs=pl.BlockSpec((bn, O4, t_hw), lambda i, j: (i, 0, j)),
        ),
        compiler_params=pltpu.CompilerParams(
            dimension_semantics=("parallel", "parallel"),
            vmem_limit_bytes=vmem_limit,
        ),
        cost_estimate=cost,
    )(w_mat, b_mat, x3)

    out6 = out3.reshape(N, O, 2, 2, H, W)           # (n, o, dy, dx, h, w)
    if not depth_to_space:
        return out6                                 # blocked layout, no extra HBM pass
    # Single XLA depth-to-space pass back to NCHW (half the read bytes when out_dtype=bf16).
    return out6.transpose(0, 1, 4, 2, 5, 3).reshape(N, O, 2 * H, 2 * W)


# --------------------------------------------------------------------------- reference

def _reference(x_nchw, weight, bias):
    # Pure-JAX dense reference for the stride-2, k=2, pad=0 transposed conv + tanh.
    N, C, H, W = x_nchw.shape
    O = weight.shape[1]
    y = jnp.einsum('nchw,coyx->nohywx', x_nchw, weight)    # (N, O, H, 2, W, 2)
    y = y.reshape(N, O, 2 * H, 2 * W) + bias.reshape(1, O, 1, 1)
    return jnp.tanh(y)


# --------------------------------------------------------------------------- main

if __name__ == "__main__":
    key = jax.random.PRNGKey(0)
    kx, kw, kb = jax.random.split(key, 3)

    N, C, H, W = 2, 4, 16, 16
    O = 8

    x = jax.random.normal(kx, (N, C, H, W), dtype=jnp.float32)
    # deterministic parameter init (uniform, PyTorch-like scale)
    fan_in = C * 2 * 2
    bound = 1.0 / (fan_in ** 0.5)
    weight = jax.random.uniform(kw, (C, O, 2, 2), jnp.float32, -bound, bound)
    bias = jax.random.uniform(kb, (O,), jnp.float32, -bound, bound)

    ref = _reference(x, weight, bias)

    # Default path: f32 end-to-end, exact vs reference.
    out = jax.block_until_ready(convtranspose2d_tanh(x, weight, bias))
    assert out.shape == (N, O, 2 * H, 2 * W)
    assert jnp.allclose(out, ref, atol=1e-5, rtol=1e-5)

    # Reduced-bandwidth output path: bf16 store (tanh still computed in f32).
    out_bf16 = jax.block_until_ready(
        convtranspose2d_tanh(x, weight, bias, out_dtype=jnp.bfloat16))
    assert out_bf16.dtype == jnp.bfloat16
    assert jnp.allclose(out_bf16.astype(jnp.float32), ref, atol=2e-2, rtol=0)

    # Layout-tolerant-consumer path: skip the depth-to-space pass entirely.
    blocked = jax.block_until_ready(
        convtranspose2d_tanh(x, weight, bias, depth_to_space=False))
    assert blocked.shape == (N, O, 2, 2, H, W)
    re = blocked.transpose(0, 1, 4, 2, 5, 3).reshape(N, O, 2 * H, 2 * W)
    assert jnp.allclose(re, ref, atol=1e-5, rtol=1e-5)

    print("KERNEL_OK")
</pallas_src>

<mosaic_0001>
module attributes {stable_mosaic.version = 11 : i64} {
  func.func @_convt2x2_tanh_kernel(%arg0: i32, %arg1: i32, %arg2: memref<32x4xf32, #tpu.memory_space<vmem>>, %arg3: memref<32x1xf32, #tpu.memory_space<vmem>>, %arg4: memref<2x4x256xf32, #tpu.memory_space<vmem>>, %arg5: memref<2x32x256xf32, #tpu.memory_space<vmem>>) attributes {dimension_semantics = [#tpu.dimension_semantics<parallel>, #tpu.dimension_semantics<parallel>], iteration_bounds = array<i64: 1, 1>, scalar_prefetch = 0 : i64, scratch_operands = 0 : i64, tpu.core_type = #tpu.core_type<tc>, window_params = [{pipeline_mode = #tpu.pipeline_mode<synchronous>, transform_indices = @transform_0, window_bounds = array<i64: 32, 4>}, {pipeline_mode = #tpu.pipeline_mode<synchronous>, transform_indices = @transform_1, window_bounds = array<i64: 32, 1>}, {transform_indices = @transform_2, window_bounds = array<i64: 2, 4, 256>}, {transform_indices = @transform_3, window_bounds = array<i64: 2, 32, 256>}]} {
    %c0 = arith.constant 0 : index
    %c0_0 = arith.constant 0 : index
    %0 = vector.load %arg2[%c0, %c0_0] : memref<32x4xf32, #tpu.memory_space<vmem>>, vector<32x4xf32>
    %c0_1 = arith.constant 0 : index
    %c0_2 = arith.constant 0 : index
    %1 = vector.load %arg3[%c0_1, %c0_2] : memref<32x1xf32, #tpu.memory_space<vmem>>, vector<32x1xf32>
    %c0_3 = arith.constant 0 : index
    %c0_4 = arith.constant 0 : index
    %c0_5 = arith.constant 0 : index
    %2 = vector.load %arg4[%c0_3, %c0_4, %c0_5] : memref<2x4x256xf32, #tpu.memory_space<vmem>>, vector<1x4x256xf32>
    %3 = vector.shape_cast %2 : vector<1x4x256xf32> to vector<4x256xf32>
    %cst = arith.constant dense<0.000000e+00> : vector<32x256xf32>
    %4 = tpu.matmul %0, %3, %cst {dimension_numbers = #tpu.dot_dimension_numbers<[1], [0], [0], [1], [0, 0, 1, 1], [], []>} : vector<32x4xf32>, vector<4x256xf32>, vector<32x256xf32> -> vector<32x256xf32>
    %5 = vector.broadcast %1 : vector<32x1xf32> to vector<32x256xf32>
    %6 = arith.addf %4, %5 : vector<32x256xf32>
    %7 = math.tanh %6 : vector<32x256xf32>
    %c0_6 = arith.constant 0 : index
    %c0_7 = arith.constant 0 : index
    %c0_8 = arith.constant 0 : index
    %8 = vector.load %arg5[%c0_6, %c0_7, %c0_8] : memref<2x32x256xf32, #tpu.memory_space<vmem>>, vector<1x32x256xf32>
    %9 = vector.shape_cast %8 : vector<1x32x256xf32> to vector<32x256xf32>
    %10 = vector.shape_cast %7 : vector<32x256xf32> to vector<1x32x256xf32>
    tpu.vector_store %arg5[%c0_6, %c0_7, %c0_8], %10 {strides = array<i32>} : memref<2x32x256xf32, #tpu.memory_space<vmem>>, vector<1x32x256xf32>,
    %c1 = arith.constant 1 : index
    %c0_9 = arith.constant 0 : index
    %c0_10 = arith.constant 0 : index
    %11 = vector.load %arg4[%c1, %c0_9, %c0_10] : memref<2x4x256xf32, #tpu.memory_space<vmem>>, vector<1x4x256xf32>
    %12 = vector.shape_cast %11 : vector<1x4x256xf32> to vector<4x256xf32>
    %cst_11 = arith.constant dense<0.000000e+00> : vector<32x256xf32>
    %13 = tpu.matmul %0, %12, %cst_11 {dimension_numbers = #tpu.dot_dimension_numbers<[1], [0], [0], [1], [0, 0, 1, 1], [], []>} : vector<32x4xf32>, vector<4x256xf32>, vector<32x256xf32> -> vector<32x256xf32>
    %14 = vector.broadcast %1 : vector<32x1xf32> to vector<32x256xf32>
    %15 = arith.addf %13, %14 : vector<32x256xf32>
    %16 = math.tanh %15 : vector<32x256xf32>
    %c1_12 = arith.constant 1 : index
    %c0_13 = arith.constant 0 : index
    %c0_14 = arith.constant 0 : index
    %17 = vector.load %arg5[%c1_12, %c0_13, %c0_14] : memref<2x32x256xf32, #tpu.memory_space<vmem>>, vector<1x32x256xf32>
    %18 = vector.shape_cast %17 : vector<1x32x256xf32> to vector<32x256xf32>
    %19 = vector.shape_cast %16 : vector<32x256xf32> to vector<1x32x256xf32>
    tpu.vector_store %arg5[%c1_12, %c0_13, %c0_14], %19 {strides = array<i32>} : memref<2x32x256xf32, #tpu.memory_space<vmem>>, vector<1x32x256xf32>,
    return
  }
  func.func @transform_0(%arg0: i32, %arg1: i32) -> (i32, i32) {
    %c0_i32 = arith.constant 0 : i32
    %c0_i32_0 = arith.constant 0 : i32
    %c0_i32_1 = arith.constant 0 : i32
    return %c0_i32, %c0_i32_0 : i32, i32
  }
  func.func @transform_1(%arg0: i32, %arg1: i32) -> (i32, i32) {
    %c0_i32 = arith.constant 0 : i32
    %c0_i32_0 = arith.constant 0 : i32
    %c0_i32_1 = arith.constant 0 : i32
    return %c0_i32, %c0_i32_0 : i32, i32
  }
  func.func @transform_2(%arg0: i32, %arg1: i32) -> (i32, i32, i32) {
    %c0_i32 = arith.constant 0 : i32
    %c0_i32_0 = arith.constant 0 : i32
    return %arg0, %c0_i32, %arg1 : i32, i32, i32
  }
  func.func @transform_3(%arg0: i32, %arg1: i32) -> (i32, i32, i32) {
    %c0_i32 = arith.constant 0 : i32
    %c0_i32_0 = arith.constant 0 : i32
    return %arg0, %c0_i32, %arg1 : i32, i32, i32
  }
}

</mosaic_0001>

<llo_original>
// kernel: tpu_custom_call.1
$region0: #{tpu_custom_call.1}
  #allocation0 [shape = 'u32[]', space=smem, size = 0x4, offset = 0x4, fixed_abs, tag = 'smem constant byte address 0x4 - core index']
  #allocation1 [shape = 'u32[144,128]{1,0:T(1,128)}', space=vmem, size = 0x12000, scoped, tag = 'internal scratch']
  %s0 = inlined_call_operand.vmem [shape: f32[32,4], index: 0, kind: input, shape index: {}]
  %s1 = inlined_call_operand.vmem [shape: f32[32,1], index: 1, kind: input, shape index: {}]
  %s2 = inlined_call_operand.vmem [shape: f32[2,4,256], index: 2, kind: input, shape index: {}]
  %s3 = inlined_call_operand.hbm [shape: f32[2,32,256], index: 3, kind: output, shape index: {}]
  %s4 = sld [smem:[#allocation0]]
  $region22: #{tpu_custom_call.1} parent=0
    _
  %s6 = ssub.s32 1, %s4
  %s7 = scalar_select 0, %s6, %s4
  $region1: #{tpu_custom_call.1} parent=0
    #allocation2 [shape = 'u8[65536]{0}', space=vmem, size = 0x10000, scoped, tag = 'output window, operand 0, single buffered']
    #allocation3 [shape = 's32[1]{0}', space=sflag, size = 0x4, scoped, tag = 'scoped memory for tpu_custom_call.1']
    %8 = vsyncpa [#allocation3], 0
    // Predicated region
    $region2: #{tpu_custom_call.1} parent=1 // pred_check
      _
    $region3: #{tpu_custom_call.1} parent=1 // pred_check_branch
      %10 = sbr.rel (0) target = $region5
    $region4: #{tpu_custom_call.1} parent=1 // pred_region
      _
    $region5: #{tpu_custom_call.1} parent=1 // pred_fallthru
      _
    // Predicated region
    $region6: #{tpu_custom_call.1} parent=1 // pred_check
      _
    $region7: #{tpu_custom_call.1} parent=1 // pred_check_branch
      %12 = sbr.rel (0) target = $region9
    $region8: #{tpu_custom_call.1} parent=1 // pred_region
      _
    $region9: #{tpu_custom_call.1} parent=1 // pred_fallthru
      _
    // Predicated region
    $region10: #{tpu_custom_call.1} parent=1 // pred_check
      _
    $region11: #{tpu_custom_call.1} parent=1 // pred_check_branch
      %14 = sbr.rel (0) target = $region13
    $region12: #{tpu_custom_call.1} parent=1 // pred_region
      _
    $region13: #{tpu_custom_call.1} parent=1 // pred_fallthru
      _
    %v15 = vld [vmem:[%s0] sm:$0xff]
    %v16 = vld [vmem:[%s0 + $0x8] sm:$0xff]
    %v17 = vld [vmem:[%s0 + $0x10] sm:$0xff]
    %v18 = vld [vmem:[%s0 + $0x18] sm:$0xff]
    %v19 = vld [vmem:[%s1] sm:$0xff]
    %v20 = vld [vmem:[%s1 + $0x8] sm:$0xff]
    %v21 = vld [vmem:[%s1 + $0x10] sm:$0xff]
    %v22 = vld [vmem:[%s1 + $0x18] sm:$0xff]
    %v23 = vld [vmem:[%s2] sm:$0xff]
    %25 = vset.pattern.permute.xlu0 0
    %26 = vperm.xlu0 %25, %v19
    %v27 = vpop.permute.xlu0 %26
    %30 = vset.pattern.permute.xlu0 0
    %31 = vperm.xlu0 %30, %v20
    %v32 = vpop.permute.xlu0 %31
    %35 = vset.pattern.permute.xlu0 0
    %36 = vperm.xlu0 %35, %v21
    %v37 = vpop.permute.xlu0 %36
    %40 = vset.pattern.permute.xlu0 0
    %41 = vperm.xlu0 %40, %v22
    %v42 = vpop.permute.xlu0 %41
    %v45 = vcombine.high %v23, %v23
    %vm46 = vcmask 31744
    %v48 = vsel %vm46, %v15, 0
    %v51 = vsel %vm46, %v16, 0
    %v54 = vsel %vm46, %v17, 0
    %v57 = vsel %vm46, %v18, 0
    %vm59 = vcmask 1043456
    %v60 = vsel %vm59, %v23, 0
    %v62 = vsel %vm59, %v45, 0
    %64 = vmatprep.subr.mxu0 %v62
    %65 = vmatpush1.msra.mxu0 %v60
    %66 = vmatprep.subr.mxu0 0.0
    %67 = vmatpush1.msra.mxu0 0.0
    %68 = vmatprep.subr.mxu0 0.0
    %69 = vmatpush1.msra.mxu0 0.0
    %70 = vmatprep.subr.mxu0 0.0
    %71 = vmatpush1.msra.mxu0 0.0
    %72 = vmatprep.subr.mxu0 0.0
    %73 = vmatpush1.msra.mxu0 0.0
    %74 = vmatprep.subr.mxu0 0.0
    %75 = vmatpush1.msra.mxu0 0.0
    %76 = vmatprep.subr.mxu0 0.0
    %77 = vmatpush1.msra.mxu0 0.0
    %78 = vmatprep.subr.mxu0 0.0
    %79 = vmatpush1.msra.mxu0 0.0
    %80 = vmatprep.subr.mxu0 0.0
    %81 = vmatpush1.msra.mxu0 0.0
    %82 = vmatprep.subr.mxu0 0.0
    %83 = vmatpush1.msra.mxu0 0.0
    %84 = vmatprep.subr.mxu0 0.0
    %85 = vmatpush1.msra.mxu0 0.0
    %86 = vmatprep.subr.mxu0 0.0
    %87 = vmatpush1.msra.mxu0 0.0
    %88 = vmatprep.subr.mxu0 0.0
    %89 = vmatpush1.msra.mxu0 0.0
    %90 = vmatprep.subr.mxu0 0.0
    %91 = vmatpush1.msra.mxu0 0.0
    %92 = vmatprep.subr.mxu0 0.0
    %93 = vmatpush1.msra.mxu0 0.0
    %94 = vmatprep.subr.mxu0 0.0
    %95 = vmatpush1.msra.mxu0 0.0
    %96 = vmatprep.subr.mxu0 0.0
    %97 = vmatpush1.msra.mxu0 0.0
    %98 = vmatprep.subr.mxu0 0.0
    %99 = vmatpush1.msra.mxu0 0.0
    %100 = vmatprep.subr.mxu0 0.0
    %101 = vmatpush1.msra.mxu0 0.0
    %102 = vmatprep.subr.mxu0 0.0
    %103 = vmatpush1.msra.mxu0 0.0
    %104 = vmatprep.subr.mxu0 0.0
    %105 = vmatpush1.msra.mxu0 0.0
    %106 = vmatprep.subr.mxu0 0.0
    %107 = vmatpush1.msra.mxu0 0.0
    %108 = vmatprep.subr.mxu0 0.0
    %109 = vmatpush1.msra.mxu0 0.0
    %110 = vmatprep.subr.mxu0 0.0
    %111 = vmatpush1.msra.mxu0 0.0
    %112 = vmatprep.subr.mxu0 0.0
    %113 = vmatpush1.msra.mxu0 0.0
    %114 = vmatprep.subr.mxu0 0.0
    %115 = vmatpush1.msra.mxu0 0.0
    %116 = vmatprep.subr.mxu0 0.0
    %117 = vmatpush1.msra.mxu0 0.0
    %118 = vmatprep.subr.mxu0 0.0
    %119 = vmatpush1.msra.mxu0 0.0
    %120 = vmatprep.subr.mxu0 0.0
    %121 = vmatpush1.msra.mxu0 0.0
    %122 = vmatprep.subr.mxu0 0.0
    %123 = vmatpush1.msra.mxu0 0.0
    %124 = vmatprep.subr.mxu0 0.0
    %125 = vmatpush1.msra.mxu0 0.0
    %126 = vmatprep.subr.mxu0 0.0
    %127 = vmatpush1.msra.mxu0 0.0
    %128 = vmatprep.mubr.f32.mxu0 0.0
    %129 = vmatmul.mubr.f32.gmra.mrb[0].mxu0 %v48
    %v130 = vpop.f32.mrb[0].mxu0
    %v131 = vadd.f32 %v27, %v130
    %v132 = vpop.f32.mrb[0].mxu0
    %v133 = vadd.f32 %v27, %v132
    %134 = vmatprep.mubr.f32.mxu0 0.0
    %135 = vmatmul.mubr.f32.gmra.mrb[0].mxu0 %v51
    %v136 = vpop.f32.mrb[0].mxu0
    %v137 = vadd.f32 %v32, %v136
    %v138 = vpop.f32.mrb[0].mxu0
    %v139 = vadd.f32 %v32, %v138
    %140 = vmatprep.mubr.f32.mxu0 0.0
    %141 = vmatmul.mubr.f32.gmra.mrb[0].mxu0 %v54
    %v142 = vpop.f32.mrb[0].mxu0
    %v143 = vadd.f32 %v37, %v142
    %v144 = vpop.f32.mrb[0].mxu0
    %v145 = vadd.f32 %v37, %v144
    %146 = vmatprep.mubr.f32.mxu0 0.0
    %147 = vmatmul.mubr.f32.gmra.mrb[0].mxu0 %v57
    %v148 = vpop.f32.mrb[0].mxu0
    %v149 = vadd.f32 %v42, %v148
    %v150 = vpop.f32.mrb[0].mxu0
    %v151 = vadd.f32 %v42, %v150
    %152 = vdwg.mxu0
    %v153 = vtanh.pop %v131
    %v154 = vtanh.pop %v133
    %v155 = vtanh.pop %v137
    %v156 = vtanh.pop %v139
    %v157 = vtanh.pop %v143
    %v158 = vtanh.pop %v145
    %v159 = vtanh.pop %v149
    %v160 = vtanh.pop %v151
    %161 = vst [vmem:[#allocation2] sm:$0xff] %v153
    %162 = vst [vmem:[#allocation2 + $0x8] sm:$0xff] %v154
    %163 = vst [vmem:[#allocation2 + $0x10] sm:$0xff] %v155
    %164 = vst [vmem:[#allocation2 + $0x18] sm:$0xff] %v156
    %165 = vst [vmem:[#allocation2 + $0x20] sm:$0xff] %v157
    %166 = vst [vmem:[#allocation2 + $0x28] sm:$0xff] %v158
    %167 = vst [vmem:[#allocation2 + $0x30] sm:$0xff] %v159
    %168 = vst [vmem:[#allocation2 + $0x38] sm:$0xff] %v160
    %s169 = scalar_lea.vmem %s2, 8
    %v170 = vld [vmem:[%s169] sm:$0xff]
    %v172 = vcombine.high %v170, %v170
    %v173 = vsel %vm59, %v170, 0
    %v175 = vsel %vm59, %v172, 0
    %177 = vmatprep.subr.mxu0 %v175
    %178 = vmatpush1.msra.mxu0 %v173
    %179 = vmatprep.subr.mxu0 0.0
    %180 = vmatpush1.msra.mxu0 0.0
    %181 = vmatprep.subr.mxu0 0.0
    %182 = vmatpush1.msra.mxu0 0.0
    %183 = vmatprep.subr.mxu0 0.0
    %184 = vmatpush1.msra.mxu0 0.0
    %185 = vmatprep.subr.mxu0 0.0
    %186 = vmatpush1.msra.mxu0 0.0
    %187 = vmatprep.subr.mxu0 0.0
    %188 = vmatpush1.msra.mxu0 0.0
    %189 = vmatprep.subr.mxu0 0.0
    %190 = vmatpush1.msra.mxu0 0.0
    %191 = vmatprep.subr.mxu0 0.0
    %192 = vmatpush1.msra.mxu0 0.0
    %193 = vmatprep.subr.mxu0 0.0
    %194 = vmatpush1.msra.mxu0 0.0
    %195 = vmatprep.subr.mxu0 0.0
    %196 = vmatpush1.msra.mxu0 0.0
    %197 = vmatprep.subr.mxu0 0.0
    %198 = vmatpush1.msra.mxu0 0.0
    %199 = vmatprep.subr.mxu0 0.0
    %200 = vmatpush1.msra.mxu0 0.0
    %201 = vmatprep.subr.mxu0 0.0
    %202 = vmatpush1.msra.mxu0 0.0
    %203 = vmatprep.subr.mxu0 0.0
    %204 = vmatpush1.msra.mxu0 0.0
    %205 = vmatprep.subr.mxu0 0.0
    %206 = vmatpush1.msra.mxu0 0.0
    %207 = vmatprep.subr.mxu0 0.0
    %208 = vmatpush1.msra.mxu0 0.0
    %209 = vmatprep.subr.mxu0 0.0
    %210 = vmatpush1.msra.mxu0 0.0
    %211 = vmatprep.subr.mxu0 0.0
    %212 = vmatpush1.msra.mxu0 0.0
    %213 = vmatprep.subr.mxu0 0.0
    %214 = vmatpush1.msra.mxu0 0.0
    %215 = vmatprep.subr.mxu0 0.0
    %216 = vmatpush1.msra.mxu0 0.0
    %217 = vmatprep.subr.mxu0 0.0
    %218 = vmatpush1.msra.mxu0 0.0
    %219 = vmatprep.subr.mxu0 0.0
    %220 = vmatpush1.msra.mxu0 0.0
    %221 = vmatprep.subr.mxu0 0.0
    %222 = vmatpush1.msra.mxu0 0.0
    %223 = vmatprep.subr.mxu0 0.0
    %224 = vmatpush1.msra.mxu0 0.0
    %225 = vmatprep.subr.mxu0 0.0
    %226 = vmatpush1.msra.mxu0 0.0
    %227 = vmatprep.subr.mxu0 0.0
    %228 = vmatpush1.msra.mxu0 0.0
    %229 = vmatprep.subr.mxu0 0.0
    %230 = vmatpush1.msra.mxu0 0.0
    %231 = vmatprep.subr.mxu0 0.0
    %232 = vmatpush1.msra.mxu0 0.0
    %233 = vmatprep.subr.mxu0 0.0
    %234 = vmatpush1.msra.mxu0 0.0
    %235 = vmatprep.subr.mxu0 0.0
    %236 = vmatpush1.msra.mxu0 0.0
    %237 = vmatprep.subr.mxu0 0.0
    %238 = vmatpush1.msra.mxu0 0.0
    %239 = vmatprep.subr.mxu0 0.0
    %240 = vmatpush1.msra.mxu0 0.0
    %241 = vmatprep.mubr.f32.mxu0 0.0
    %242 = vmatmul.mubr.f32.gmra.mrb[0].mxu0 %v48
    %v243 = vpop.f32.mrb[0].mxu0
    %v244 = vadd.f32 %v27, %v243
    %v245 = vpop.f32.mrb[0].mxu0
    %v246 = vadd.f32 %v27, %v245
    %247 = vmatprep.mubr.f32.mxu0 0.0
    %248 = vmatmul.mubr.f32.gmra.mrb[0].mxu0 %v51
    %v249 = vpop.f32.mrb[0].mxu0
    %v250 = vadd.f32 %v32, %v249
    %v251 = vpop.f32.mrb[0].mxu0
    %v252 = vadd.f32 %v32, %v251
    %253 = vmatprep.mubr.f32.mxu0 0.0
    %254 = vmatmul.mubr.f32.gmra.mrb[0].mxu0 %v54
    %v255 = vpop.f32.mrb[0].mxu0
    %v256 = vadd.f32 %v37, %v255
    %v257 = vpop.f32.mrb[0].mxu0
    %v258 = vadd.f32 %v37, %v257
    %259 = vmatprep.mubr.f32.mxu0 0.0
    %260 = vmatmul.mubr.f32.gmra.mrb[0].mxu0 %v57
    %v261 = vpop.f32.mrb[0].mxu0
    %v262 = vadd.f32 %v42, %v261
    %v263 = vpop.f32.mrb[0].mxu0
    %v264 = vadd.f32 %v42, %v263
    %265 = vdwg.mxu0
    %v266 = vtanh.pop %v244
    %v267 = vtanh.pop %v246
    %v268 = vtanh.pop %v250
    %v269 = vtanh.pop %v252
    %v270 = vtanh.pop %v256
    %v271 = vtanh.pop %v258
    %v272 = vtanh.pop %v262
    %v273 = vtanh.pop %v264
    %s274 = scalar_lea.vmem [#allocation2], 64
    %275 = vst [vmem:[%s274] sm:$0xff] %v266
    %276 = vst [vmem:[%s274 + $0x8] sm:$0xff] %v267
    %277 = vst [vmem:[%s274 + $0x10] sm:$0xff] %v268
    %278 = vst [vmem:[%s274 + $0x18] sm:$0xff] %v269
    %279 = vst [vmem:[%s274 + $0x20] sm:$0xff] %v270
    %280 = vst [vmem:[%s274 + $0x28] sm:$0xff] %v271
    %281 = vst [vmem:[%s274 + $0x30] sm:$0xff] %v272
    %282 = vst [vmem:[%s274 + $0x38] sm:$0xff] %v273
    // Predicated region
    $region14: #{tpu_custom_call.1} parent=1 // pred_check
      _
    $region15: #{tpu_custom_call.1} parent=1 // pred_check_branch
      %284 = sbr.rel (0) target = $region17
    $region16: #{tpu_custom_call.1} parent=1 // pred_region
      %s286 = ssub.s32 2048, 2048
      %287 = vsyncadd [#allocation3], %s286
      %s288 = sshll.u32 [#allocation2], 4
      %s289 = int_to_ptr.vmem [resolvable:$true] %s288
      %294 = dma.vmem_to_hbm [thread:$0]  %s289, 2048, %s3, [#allocation3], 256, 256, 16
    $region17: #{tpu_custom_call.1} parent=1 // pred_fallthru
      _
    // Predicated region
    $region18: #{tpu_custom_call.1} parent=1 // pred_check
      _
    $region19: #{tpu_custom_call.1} parent=1 // pred_check_branch
      %296 = sbr.rel (0) target = $region21
    $region20: #{tpu_custom_call.1} parent=1 // pred_region
      %297 = dma.done [#allocation3], 2048
    $region21: #{tpu_custom_call.1} parent=1 // pred_fallthru
      _
    %298 = vsyncpa [#allocation3], 1

</llo_original>
